<compile_context>
chip_gen: v7x
topology: tpu7x:2x2x1
jax: 0.10.0
libtpu: 0.0.40
codegen_flags: <defaults>
</compile_context>

<pallas_src>
import jax
import jax.numpy as jnp
from jax.experimental import pallas as pl
from jax.experimental.pallas import tpu as pltpu

IN_F = 20       # linear1 in_features
HID = 4         # linear1 out_features / linear2 in_features
OUT_F = 8       # linear2 out_features
LANES = 128     # TPU vreg lane width
SLAB_ROWS = 9   # rows 0..8 used; padded to one-and-a-bit (8,128) tiles by Mosaic

# Packed-parameter slab layout (f32[9,128]):
#   rows 0..3 : [ W1 (4x20) | b1 (4x1 at lane 20) | zeros ]
#   rows 4..7 : [ W2^T (4x8)                      | zeros ]
#   row  8    : [ b2  (1x8)                       | zeros ]


def mlp_kernel(x_ref, p_ref, o_ref):
    # x_ref: (1, 20)  natural input row
    # p_ref: (9, 128) packed parameter slab (layout above)
    # o_ref: (1, 8)   real output (single masked-row store)
    x = x_ref[...]                                           # (1, 20)
    w1 = p_ref[0:HID, 0:IN_F]                                # (4, 20)
    b1 = p_ref[0:HID, IN_F:IN_F + 1]                         # (4, 1)
    # layer 1: s1[j] = sum_k x[k] * W1[j,k] + b1[j]   VPU mul + XLU lane-reduce
    s1 = jnp.sum(x * w1, axis=1, keepdims=True) + b1         # (4, 1)
    v1 = jnp.tanh(s1)                                        # (4, 1)  EUP
    # layer 2: y[j] = sum_k v1[k] * W2T[k,j] + b2[j]  VPU mul + XLU sublane-reduce
    w2t = p_ref[HID:2 * HID, 0:OUT_F]                        # (4, 8)
    b2 = p_ref[2 * HID:2 * HID + 1, 0:OUT_F]                 # (1, 8)
    o_ref[...] = jnp.sum(v1 * w2t, axis=0, keepdims=True) + b2  # (1, 8)


def pack_params(w1, b1, w2, b2):
    """Pack PyTorch-layout params (w1:(4,20), b1:(4,), w2:(8,4), b2:(8,)) into one slab."""
    slab = jnp.zeros((SLAB_ROWS, LANES), jnp.float32)
    slab = slab.at[0:HID, 0:IN_F].set(w1)
    slab = slab.at[0:HID, IN_F].set(b1)            # b1 column sits at lane IN_F
    slab = slab.at[HID:2 * HID, 0:OUT_F].set(w2.T)
    slab = slab.at[2 * HID, 0:OUT_F].set(b2)
    return slab


@jax.jit
def model_forward(x, packed_params):
    # Batch is 1 per the module spec (x1 = torch.randn(1, 20)); the
    # sublane-broadcast contraction in the kernel relies on it.
    # TODO(synk): for batch > 1, add an (8,128)-aligned batch grid axis marked
    # "parallel" (v7x megacore) and switch both layers to jnp.dot on the MXU.
    batch = x.shape[0]
    assert batch == 1 and x.shape[1] == IN_F

    cost = pl.CostEstimate(
        flops=2 * IN_F * HID + 2 * HID * OUT_F + HID + OUT_F,   # ~232
        transcendentals=HID,                                    # 4 tanh
        bytes_accessed=(SLAB_ROWS * LANES + IN_F + OUT_F) * 4,
    )

    return pl.pallas_call(
        mlp_kernel,
        out_shape=jax.ShapeDtypeStruct((batch, OUT_F), jnp.float32),
        in_specs=[
            pl.BlockSpec(memory_space=pltpu.MemorySpace.VMEM),   # x      : one DMA
            pl.BlockSpec(memory_space=pltpu.MemorySpace.VMEM),   # params : one DMA
        ],
        out_specs=pl.BlockSpec(memory_space=pltpu.MemorySpace.VMEM),
        cost_estimate=cost,
    )(x, packed_params)


def init_params(key):
    """PyTorch nn.Linear default init: U(-1/sqrt(fan_in), 1/sqrt(fan_in)), PyTorch layout."""
    k1, k2, k3, k4 = jax.random.split(key, 4)
    bound1 = 1.0 / (IN_F ** 0.5)
    bound2 = 1.0 / (HID ** 0.5)
    w1 = jax.random.uniform(k1, (HID, IN_F), jnp.float32, -bound1, bound1)   # (4, 20)
    b1 = jax.random.uniform(k2, (HID,), jnp.float32, -bound1, bound1)        # (4,)
    w2 = jax.random.uniform(k3, (OUT_F, HID), jnp.float32, -bound2, bound2)  # (8, 4)
    b2 = jax.random.uniform(k4, (OUT_F,), jnp.float32, -bound2, bound2)      # (8,)
    return w1, b1, w2, b2


if __name__ == "__main__":
    key = jax.random.PRNGKey(0)
    k_x, k_p = jax.random.split(key)

    # module's example input: torch.randn(1, 20)
    x1 = jax.random.normal(k_x, (1, IN_F), jnp.float32)
    w1, b1, w2, b2 = init_params(k_p)
    packed = pack_params(w1, b1, w2, b2)

    out = model_forward(x1, packed)
    out = jax.block_until_ready(out)

    # pure-JAX reference of the well-defined portion of the forward
    v1_ref = jnp.tanh(x1 @ w1.T + b1)
    y_ref = v1_ref @ w2.T + b2
    assert out.shape == (1, OUT_F)
    assert jnp.allclose(out, y_ref, atol=1e-5, rtol=1e-5), "mismatch vs reference"

    print("KERNEL_OK")
</pallas_src>

<mosaic_0001>
module attributes {stable_mosaic.version = 11 : i64} {
  func.func @mlp_kernel(%arg0: memref<1x20xf32, #tpu.memory_space<vmem>>, %arg1: memref<9x128xf32, #tpu.memory_space<vmem>>, %arg2: memref<1x8xf32, #tpu.memory_space<vmem>>) attributes {dimension_semantics = [], scalar_prefetch = 0 : i64, scratch_operands = 0 : i64, tpu.core_type = #tpu.core_type<tc>} {
    %c0 = arith.constant 0 : index
    %c0_0 = arith.constant 0 : index
    %0 = vector.load %arg0[%c0, %c0_0] : memref<1x20xf32, #tpu.memory_space<vmem>>, vector<1x20xf32>
    %c0_1 = arith.constant 0 : index
    %c0_2 = arith.constant 0 : index
    %1 = vector.load %arg1[%c0_1, %c0_2] : memref<9x128xf32, #tpu.memory_space<vmem>>, vector<4x20xf32>
    %c0_3 = arith.constant 0 : index
    %c20 = arith.constant 20 : index
    %2 = vector.load %arg1[%c0_3, %c20] : memref<9x128xf32, #tpu.memory_space<vmem>>, vector<4x1xf32>
    %3 = vector.broadcast %0 : vector<1x20xf32> to vector<4x20xf32>
    %4 = arith.mulf %3, %1 : vector<4x20xf32>
    %cst = arith.constant dense<0.000000e+00> : vector<4xf32>
    %5 = vector.multi_reduction <add>, %4, %cst [1] : vector<4x20xf32> to vector<4xf32>
    %6 = vector.shape_cast %5 : vector<4xf32> to vector<4x1xf32>
    %7 = arith.addf %6, %2 : vector<4x1xf32>
    %8 = math.tanh %7 : vector<4x1xf32>
    %c4 = arith.constant 4 : index
    %c0_4 = arith.constant 0 : index
    %9 = vector.load %arg1[%c4, %c0_4] : memref<9x128xf32, #tpu.memory_space<vmem>>, vector<4x8xf32>
    %c8 = arith.constant 8 : index
    %c0_5 = arith.constant 0 : index
    %10 = vector.load %arg1[%c8, %c0_5] : memref<9x128xf32, #tpu.memory_space<vmem>>, vector<1x8xf32>
    %11 = vector.broadcast %8 : vector<4x1xf32> to vector<4x8xf32>
    %12 = arith.mulf %11, %9 : vector<4x8xf32>
    %cst_6 = arith.constant dense<0.000000e+00> : vector<8xf32>
    %13 = vector.multi_reduction <add>, %12, %cst_6 [0] : vector<4x8xf32> to vector<8xf32>
    %14 = vector.shape_cast %13 : vector<8xf32> to vector<1x8xf32>
    %15 = arith.addf %14, %10 : vector<1x8xf32>
    %c0_7 = arith.constant 0 : index
    %c0_8 = arith.constant 0 : index
    %16 = vector.load %arg2[%c0_7, %c0_8] : memref<1x8xf32, #tpu.memory_space<vmem>>, vector<1x8xf32>
    tpu.vector_store %arg2[%c0_7, %c0_8], %15 {strides = array<i32>} : memref<1x8xf32, #tpu.memory_space<vmem>>, vector<1x8xf32>,
    return
  }
}

</mosaic_0001>

<llo_original>
// kernel: model_forward.1
$region0: #{model_forward.1}
  #allocation0 [shape = 'u32[]', space=smem, size = 0x4, offset = 0x4, fixed_abs, tag = 'smem constant byte address 0x4 - core index']
  #allocation1 [shape = 'u32[144,128]{1,0:T(1,128)}', space=vmem, size = 0x12000, scoped, tag = 'internal scratch']
  %s0 = inlined_call_operand.hbm [shape: f32[1,20], index: 0, kind: input, shape index: {}]
  %s1 = inlined_call_operand.hbm [shape: f32[9,128], index: 1, kind: input, shape index: {}]
  %s2 = inlined_call_operand.hbm [shape: f32[1,8], index: 2, kind: output, shape index: {}]
  %s3 = sld [smem:[#allocation0]]
  $region26: #{model_forward.1} parent=0
    _
  %s5 = ssub.s32 1, %s3
  %s6 = scalar_select 0, %s5, %s3
  $region1: #{model_forward.1} parent=0
    #allocation2 [shape = 'u8[512]{0}', space=vmem, size = 0x400, scoped, tag = 'input window, operand 0, single buffered']
    #allocation3 [shape = 's32[1]{0}', space=sflag, size = 0x4, scoped, tag = 'scoped memory for model_forward.1']
    #allocation4 [shape = 's32[1]{0}', space=sflag, size = 0x4, scoped, tag = 'scoped memory for model_forward.1']
    #allocation5 [shape = 'u8[8192]{0}', space=vmem, size = 0x2000, scoped, tag = 'input window, operand 1, single buffered']
    #allocation6 [shape = 's32[1]{0}', space=sflag, size = 0x4, scoped, tag = 'scoped memory for model_forward.1']
    #allocation7 [shape = 'u8[512]{0}', space=vmem, size = 0x400, scoped, tag = 'output window, operand 0, single buffered']
    %7 = vsyncpa [#allocation3], 0
    %8 = vsyncpa [#allocation6], 0
    %9 = vsyncpa [#allocation4], 0
    // Predicated region
    $region2: #{model_forward.1} parent=1 // pred_check
      _
    $region3: #{model_forward.1} parent=1 // pred_check_branch
      %11 = sbr.rel (0) target = $region5
    $region4: #{model_forward.1} parent=1 // pred_region
      %s13 = ssub.s32 16, 16
      %14 = vsyncadd [#allocation3], %s13
      %s16 = sshll.u32 [#allocation2], 4
      %s17 = int_to_ptr.vmem [resolvable:$true] %s16
      %19 = dma.hbm_to_vmem [thread:$0]  %s0, 16, %s17, [#allocation3]
    $region5: #{model_forward.1} parent=1 // pred_fallthru
      _
    // Predicated region
    $region6: #{model_forward.1} parent=1 // pred_check
      _
    $region7: #{model_forward.1} parent=1 // pred_check_branch
      %21 = sbr.rel (0) target = $region9
    $region8: #{model_forward.1} parent=1 // pred_region
      %s23 = ssub.s32 256, 256
      %24 = vsyncadd [#allocation6], %s23
      %s25 = sshll.u32 [#allocation5], 4
      %s26 = int_to_ptr.vmem [resolvable:$true] %s25
      %31 = dma.hbm_to_vmem [thread:$0]  %s1, 256, %s26, [#allocation6], 128, 128, 8
    $region9: #{model_forward.1} parent=1 // pred_fallthru
      _
    // Predicated region
    $region10: #{model_forward.1} parent=1 // pred_check
      _
    $region11: #{model_forward.1} parent=1 // pred_check_branch
      %33 = sbr.rel (0) target = $region13
    $region12: #{model_forward.1} parent=1 // pred_region
      %34 = dma.done [#allocation3], 16
    $region13: #{model_forward.1} parent=1 // pred_fallthru
      _
    // Predicated region
    $region14: #{model_forward.1} parent=1 // pred_check
      _
    $region15: #{model_forward.1} parent=1 // pred_check_branch
      %36 = sbr.rel (0) target = $region17
    $region16: #{model_forward.1} parent=1 // pred_region
      %37 = dma.done [#allocation6], 256
    $region17: #{model_forward.1} parent=1 // pred_fallthru
      _
    %v38 = vld [vmem:[#allocation2] sm:$0x1]
    %v39 = vld [vmem:[#allocation5] sm:$0xf]
    %v41 = vlaneseq
    %v42 = vshrl.u32 %v41, 7
    %v43 = vsub.s32 0, %v42
    %v44 = vrot.slane %v38, %v43
    %v46 = vmul.f32 %v44, %v39
    %vm47 = vcmask 158720
    %v48 = vsel %vm47, %v46, 0.0
    %49 = vadd.xlane.f32.xlu0 %v48
    %v50 = vpop.xlane.xlu0 %49
    %v51 = vadd.f32 %v50, %v39
    %v52 = vtanh.pop %v51
    %v53 = vld [vmem:[#allocation5 + $0x4] sm:$0xf]
    %v54 = vld [vmem:[#allocation5 + $0x8] sm:$0x1]
    %56 = vset.pattern.permute.xlu0 20
    %57 = vperm.xlu0 %56, %v52
    %v58 = vpop.permute.xlu0 %57
    %v60 = vmul.f32 %v58, %v53
    %vm61 = vcmask 60416
    %v62 = vsel %vm61, %v60, 0.0
    %v63 = vrot.slane %v62, 4
    %v64 = vadd.f32 %v62, %v63
    %v65 = vrot.slane %v64, 2
    %v66 = vadd.f32 %v64, %v65
    %v67 = vrot.slane %v66, 1
    %v68 = vadd.f32 %v66, %v67
    %v69 = vadd.f32 %v68, %v54
    %vm70 = vcmask 57344
    %71 = vst.msk [vmem:[#allocation7] sm:$0x1] %vm70, %v69
    // Predicated region
    $region18: #{model_forward.1} parent=1 // pred_check
      _
    $region19: #{model_forward.1} parent=1 // pred_check_branch
      %73 = sbr.rel (0) target = $region21
    $region20: #{model_forward.1} parent=1 // pred_region
      %s75 = ssub.s32 16, 16
      %76 = vsyncadd [#allocation4], %s75
      %s78 = sshll.u32 [#allocation7], 4
      %s79 = int_to_ptr.vmem [resolvable:$true] %s78
      %81 = dma.vmem_to_hbm [thread:$0]  %s79, 16, %s2, [#allocation4]
    $region21: #{model_forward.1} parent=1 // pred_fallthru
      _
    // Predicated region
    $region22: #{model_forward.1} parent=1 // pred_check
      _
    $region23: #{model_forward.1} parent=1 // pred_check_branch
      %83 = sbr.rel (0) target = $region25
    $region24: #{model_forward.1} parent=1 // pred_region
      %84 = dma.done [#allocation4], 16
    $region25: #{model_forward.1} parent=1 // pred_fallthru
      _
    %85 = vsyncpa [#allocation3], 1
    %86 = vsyncpa [#allocation6], 1
    %87 = vsyncpa [#allocation4], 1

</llo_original>
